<compile_context>
chip_gen: v5e
topology: v5e:2x2
jax: 0.10.0
libtpu: 0.0.40
codegen_flags: <defaults>
</compile_context>

<pallas_src>
import functools

import jax
import jax.numpy as jnp
from jax.experimental import pallas as pl
from jax.experimental.pallas import tpu as pltpu


def _round_up(x, m):
    return ((x + m - 1) // m) * m


def _round_down(x, m):
    return (x // m) * m


@functools.lru_cache(maxsize=1)
def _vmem_capacity_bytes():
    # TODO(synk): verify get_tpu_info() reports per-TensorCore VMEM on v7x
    # (64 MiB) rather than per-chip; all budgets below are clamped to 64 MiB
    # so an over-report cannot overshoot the real per-core capacity.
    try:
        cap = int(pltpu.get_tpu_info().vmem_capacity_bytes)
        if cap > 0:
            return cap
    except Exception:
        pass
    return 64 * 1024 * 1024


def _vmem_limit_for(footprint_bytes):
    """Raise the scoped-VMEM limit only when the kernel actually needs it."""
    cap = _vmem_capacity_bytes()
    default_limit = 32 << 20
    need = int(footprint_bytes) * 2          # headroom for compiler scratch
    if need <= default_limit:
        return None                          # default scoped limit is enough
    return int(min(cap * 4 // 5, cap - (8 << 20), max(default_limit, need)))


# ----------------------------------------------------------------------------
# Fully fused forward: one pallas_call, everything resident in VMEM.
# ----------------------------------------------------------------------------

def _layoutnet_fused_kernel(inp_ref, adj_ref, w1_ref, wg1_ref, wg2_ref,
                            w2a_ref, w2b_ref, w2c_ref, out_ref):
    f32 = jnp.float32
    adj = adj_ref[...]
    # x = inp @ W1
    x = jnp.dot(inp_ref[...], w1_ref[...], preferred_element_type=f32)
    # GCN1 + tanh: gnn1 = tanh(adj @ (x @ Wg1))
    support1 = jnp.dot(x, wg1_ref[...], preferred_element_type=f32)
    gnn1 = jnp.tanh(jnp.dot(adj, support1, preferred_element_type=f32))
    # GCN2: gnn2 = adj @ (gnn1 @ Wg2)
    support2 = jnp.dot(gnn1, wg2_ref[...], preferred_element_type=f32)
    gnn2 = jnp.dot(adj, support2, preferred_element_type=f32)
    # concat([x, gnn1, gnn2], 1) @ W2 == x@W2a + gnn1@W2b + gnn2@W2c (exact).
    out = (jnp.dot(x, w2a_ref[...], preferred_element_type=f32)
           + jnp.dot(gnn1, w2b_ref[...], preferred_element_type=f32)
           + jnp.dot(gnn2, w2c_ref[...], preferred_element_type=f32))
    out_ref[...] = out.astype(out_ref.dtype)


def _padded_f32_bytes(r, c):
    # Native (8, 128) vreg tiling, f32.
    return _round_up(max(r, 1), 8) * _round_up(max(c, 1), 128) * 4


def _fused_footprint_bytes(N, H1, H2, H3, OUT):
    fp = 2 * _padded_f32_bytes(N, N)                       # inp, adj
    fp += _padded_f32_bytes(N, H1)                         # weight1
    fp += _padded_f32_bytes(H1, H2) + _padded_f32_bytes(H2, H3)
    fp += (_padded_f32_bytes(H1, OUT) + _padded_f32_bytes(H2, OUT)
           + _padded_f32_bytes(H3, OUT))                   # W2 splits
    fp += _padded_f32_bytes(N, H1)                         # x
    fp += 2 * _padded_f32_bytes(N, H2)                     # support1, gnn1
    fp += 2 * _padded_f32_bytes(N, H3)                     # support2, gnn2
    fp += _padded_f32_bytes(N, OUT)                        # out
    return fp


# ----------------------------------------------------------------------------
# Tiled MXU matmul fallback (used only when the fused net exceeds VMEM).
# ----------------------------------------------------------------------------

def _mm_kernel_single_k(a_ref, b_ref, o_ref, *, activation):
    # K fits in one block: no accumulator, no init/finalize phases.
    r = jnp.dot(a_ref[...], b_ref[...], preferred_element_type=jnp.float32)
    if activation is not None:
        r = activation(r)
    o_ref[...] = r.astype(o_ref.dtype)


def _mm_kernel_reduce_k_f32(a_ref, b_ref, o_ref, *, activation):
    # f32 output block stays resident across k: accumulate directly into it
    # (no scratch accumulator, no final copy).
    @pl.when(pl.program_id(2) == 0)
    def _():
        o_ref[...] = jnp.zeros_like(o_ref)

    o_ref[...] += jnp.dot(a_ref[...], b_ref[...],
                          preferred_element_type=jnp.float32)

    if activation is not None:
        @pl.when(pl.program_id(2) == pl.num_programs(2) - 1)
        def _():
            o_ref[...] = activation(o_ref[...])


def _mm_kernel_reduce_k_acc(a_ref, b_ref, o_ref, acc_ref, *, activation):
    # Non-f32 outputs: keep an f32 accumulator scratch.
    @pl.when(pl.program_id(2) == 0)
    def _():
        acc_ref[...] = jnp.zeros_like(acc_ref)

    acc_ref[...] += jnp.dot(a_ref[...], b_ref[...],
                            preferred_element_type=jnp.float32)

    @pl.when(pl.program_id(2) == pl.num_programs(2) - 1)
    def _():
        r = acc_ref[...]
        if activation is not None:
            r = activation(r)
        o_ref[...] = r.astype(o_ref.dtype)


def _choose_tiles(Ma, Ka, Ha, itemsize, budget):
    """MXU/HBM-friendly tiles clamped to a VMEM budget."""
    tm = min(Ma, 512)
    tn = min(Ha, 512)
    tk = min(Ka, 1024)

    # Megacore (v7x, 2 TCs): only split M when each half still gets an
    # MXU-sized (>=256-row) pass; harmless on v5e/v6e.
    if Ma >= 512:
        tm = min(tm, _round_up(pl.cdiv(Ma, 2), 8))

    def footprint(tm_, tn_, tk_):
        fp = 2 * tm_ * tk_ * itemsize        # double-buffered LHS tiles
        fp += 2 * tk_ * tn_ * itemsize       # double-buffered RHS tiles
        fp += 2 * tm_ * tn_ * 4              # double-buffered output / acc
        return fp

    # Shrink tn first, then tm; keep tk as large as possible (halving tk
    # doubles the number of accumulator read-modify-write passes).
    while footprint(tm, tn, tk) > budget:
        if tn > 128:
            tn = max(128, _round_down(tn // 2, 128))
        elif tm > 8:
            tm = max(8, _round_down(tm // 2, 8))
        elif tk > 128:
            tk = max(128, _round_down(tk // 2, 128))
        else:
            break
    return tm, tn, tk


def pallas_matmul(a, b, *, activation=None):
    """activation(a @ b) via a tiled MXU kernel (dense equivalent of spmm)."""
    M, K = a.shape
    K2, H = b.shape
    assert K == K2, "inner dimensions must match"
    out_dtype = jnp.dtype(jnp.promote_types(a.dtype, b.dtype))
    itemsize = max(jnp.dtype(a.dtype).itemsize, jnp.dtype(b.dtype).itemsize)

    budget = min(_vmem_capacity_bytes(), 64 << 20) * 3 // 5

    Ma = _round_up(M, 8)
    Ka = _round_up(K, 128)
    Ha = _round_up(H, 128)
    tm, tn, tk = _choose_tiles(Ma, Ka, Ha, itemsize, budget)

    # Zero padding is exact for a matmul (and tanh(0)=0 regions are sliced
    # away).  Pads are skipped when the shapes are already aligned.
    # TODO(synk): for a large-N deployment, pre-pad the static weights once
    # outside the forward and carry padded activations through the chain.
    Mp = _round_up(M, tm)
    Kp = _round_up(K, tk)
    Hp = _round_up(H, tn)
    a_p = a if (Mp, Kp) == (M, K) else jnp.pad(a, ((0, Mp - M), (0, Kp - K)))
    b_p = b if (Kp, Hp) == (K, H) else jnp.pad(b, ((0, Kp - K), (0, Hp - H)))

    grid = (Mp // tm, Hp // tn, Kp // tk)
    if grid[2] == 1:
        kernel = functools.partial(_mm_kernel_single_k, activation=activation)
        scratch = []
    elif out_dtype == jnp.float32:
        kernel = functools.partial(_mm_kernel_reduce_k_f32,
                                   activation=activation)
        scratch = []
    else:
        kernel = functools.partial(_mm_kernel_reduce_k_acc,
                                   activation=activation)
        scratch = [pltpu.VMEM((tm, tn), jnp.float32)]

    tile_fp = 2 * tm * tk * itemsize + 2 * tk * tn * itemsize + 2 * tm * tn * 4

    out_p = pl.pallas_call(
        kernel,
        out_shape=jax.ShapeDtypeStruct((Mp, Hp), out_dtype),
        grid_spec=pltpu.PrefetchScalarGridSpec(
            num_scalar_prefetch=0,
            grid=grid,
            in_specs=[
                pl.BlockSpec((tm, tk), lambda i, j, k: (i, k)),
                # If the whole weight fits in one block its index is constant
                # across the M loop -> it stays VMEM-resident.
                pl.BlockSpec((tk, tn), lambda i, j, k: (k, j)),
            ],
            out_specs=pl.BlockSpec((tm, tn), lambda i, j, k: (i, j)),
            scratch_shapes=scratch,
        ),
        compiler_params=pltpu.CompilerParams(
            dimension_semantics=("parallel", "parallel", "arbitrary"),
            vmem_limit_bytes=_vmem_limit_for(tile_fp),
        ),
    )(a_p, b_p)

    return out_p[:M, :H] if (Mp, Hp) != (M, H) else out_p


# ----------------------------------------------------------------------------
# Forward
# ----------------------------------------------------------------------------

def layoutnet_forward(inp, adj, weight1, gcn1_weight, gcn2_weight, weight2):
    """Pallas equivalent of LayoutNet.forward (sparse spmm operands densified)."""
    N = inp.shape[0]
    H1 = weight1.shape[1]
    H2 = gcn1_weight.shape[1]
    H3 = gcn2_weight.shape[1]
    OUT = weight2.shape[1]

    # Split W2 along rows so the concat never materializes:
    #   cat([x, gnn1, gnn2], 1) @ W2 == x@W2a + gnn1@W2b + gnn2@W2c.
    w2a = weight2[:H1]
    w2b = weight2[H1:H1 + H2]
    w2c = weight2[H1 + H2:]

    footprint = _fused_footprint_bytes(N, H1, H2, H3, OUT)
    fused_budget = min(_vmem_capacity_bytes(), 64 << 20) // 2
    if footprint * 2 <= fused_budget:
        # Whole network fits in VMEM: single fused pallas_call, all
        # intermediates stay on-chip.
        vspec = pl.BlockSpec(memory_space=pltpu.MemorySpace.VMEM)
        return pl.pallas_call(
            _layoutnet_fused_kernel,
            out_shape=jax.ShapeDtypeStruct((N, OUT), jnp.float32),
            in_specs=[vspec] * 8,
            out_specs=vspec,
            compiler_params=pltpu.CompilerParams(
                vmem_limit_bytes=_vmem_limit_for(footprint)),
        )(inp, adj, weight1, gcn1_weight, gcn2_weight, w2a, w2b, w2c)

    # Large-graph fallback: tiled MXU matmuls, concat still folded into three
    # small GEMMs.  TODO(synk): fuse each (x@Wg ; adj@support) GCN pair into a
    # single pallas_call for the large-N regime.
    x = pallas_matmul(inp, weight1)
    gnn1 = pallas_matmul(adj, pallas_matmul(x, gcn1_weight),
                         activation=jnp.tanh)
    gnn2 = pallas_matmul(adj, pallas_matmul(gnn1, gcn2_weight))
    return (pallas_matmul(x, w2a) + pallas_matmul(gnn1, w2b)
            + pallas_matmul(gnn2, w2c))


def _layoutnet_ref(inp, adj, weight1, gcn1_weight, gcn2_weight, weight2):
    x = inp @ weight1
    gnn1 = jnp.tanh(adj @ (x @ gcn1_weight))
    gnn2 = adj @ (gnn1 @ gcn2_weight)
    cat = jnp.concatenate([x, gnn1, gnn2], axis=1)
    return cat @ weight2


def _xavier_uniform(key, shape, gain):
    fan_in, fan_out = shape
    bound = gain * (6.0 / (fan_in + fan_out)) ** 0.5
    return jax.random.uniform(
        key, shape, minval=-bound, maxval=bound, dtype=jnp.float32
    )


if __name__ == "__main__":
    key = jax.random.PRNGKey(0)
    ks = jax.random.split(key, 7)

    # Small shapes consistent with the module.
    N = 64                      # num_nodes
    H1, H2, H3 = 32, 32, 16     # hidden dims
    OUT = 3                     # output_dim (3-D layout coordinates)
    LAYOUT_DIM = 3
    gain = float(N) ** (1.0 / LAYOUT_DIM)

    # Sparse (mostly-zero) input mirroring torch.spmm's sparse operand; the
    # compute semantics are identical to a dense matmul.
    vals = jax.random.normal(ks[0], (N, N), dtype=jnp.float32)
    mask = (jax.random.uniform(ks[1], (N, N)) < 0.1).astype(jnp.float32)
    inp = vals * mask

    # Symmetric 0/1 adjacency with self-loops.
    a = (jax.random.uniform(ks[2], (N, N)) < 0.08).astype(jnp.float32)
    adj = jnp.minimum(a + a.T + jnp.eye(N, dtype=jnp.float32), 1.0)

    weight1 = _xavier_uniform(ks[3], (N, H1), gain)
    gcn1_w = _xavier_uniform(ks[4], (H1, H2), gain)
    gcn2_w = _xavier_uniform(ks[5], (H2, H3), gain)
    weight2 = _xavier_uniform(ks[6], (H1 + H2 + H3, OUT), gain)

    fwd = jax.jit(layoutnet_forward)
    out = jax.block_until_ready(fwd(inp, adj, weight1, gcn1_w, gcn2_w, weight2))

    ref = _layoutnet_ref(inp, adj, weight1, gcn1_w, gcn2_w, weight2)
    assert out.shape == (N, OUT)
    rel_err = jnp.linalg.norm(out - ref) / (jnp.linalg.norm(ref) + 1e-12)
    assert float(rel_err) < 1e-2, f"relative error too large: {rel_err}"

    print("KERNEL_OK")
</pallas_src>

<mosaic_0001>
module attributes {stable_mosaic.version = 11 : i64} {
  func.func @_layoutnet_fused_kernel(%arg0: memref<64x64xf32, #tpu.memory_space<vmem>>, %arg1: memref<64x64xf32, #tpu.memory_space<vmem>>, %arg2: memref<64x32xf32, #tpu.memory_space<vmem>>, %arg3: memref<32x32xf32, #tpu.memory_space<vmem>>, %arg4: memref<32x16xf32, #tpu.memory_space<vmem>>, %arg5: memref<32x3xf32, #tpu.memory_space<vmem>>, %arg6: memref<32x3xf32, #tpu.memory_space<vmem>>, %arg7: memref<16x3xf32, #tpu.memory_space<vmem>>, %arg8: memref<64x3xf32, #tpu.memory_space<vmem>>) attributes {dimension_semantics = [], scalar_prefetch = 0 : i64, scratch_operands = 0 : i64, tpu.core_type = #tpu.core_type<tc>} {
    %c0 = arith.constant 0 : index
    %c0_0 = arith.constant 0 : index
    %0 = vector.load %arg1[%c0, %c0_0] : memref<64x64xf32, #tpu.memory_space<vmem>>, vector<64x64xf32>
    %c0_1 = arith.constant 0 : index
    %c0_2 = arith.constant 0 : index
    %1 = vector.load %arg0[%c0_1, %c0_2] : memref<64x64xf32, #tpu.memory_space<vmem>>, vector<64x64xf32>
    %c0_3 = arith.constant 0 : index
    %c0_4 = arith.constant 0 : index
    %2 = vector.load %arg2[%c0_3, %c0_4] : memref<64x32xf32, #tpu.memory_space<vmem>>, vector<64x32xf32>
    %cst = arith.constant dense<0.000000e+00> : vector<64x32xf32>
    %3 = tpu.matmul %1, %2, %cst {dimension_numbers = #tpu.dot_dimension_numbers<[1], [0], [0], [1], [0, 0, 1, 1], [], []>} : vector<64x64xf32>, vector<64x32xf32>, vector<64x32xf32> -> vector<64x32xf32>
    %c0_5 = arith.constant 0 : index
    %c0_6 = arith.constant 0 : index
    %4 = vector.load %arg3[%c0_5, %c0_6] : memref<32x32xf32, #tpu.memory_space<vmem>>, vector<32x32xf32>
    %cst_7 = arith.constant dense<0.000000e+00> : vector<64x32xf32>
    %5 = tpu.matmul %3, %4, %cst_7 {dimension_numbers = #tpu.dot_dimension_numbers<[1], [0], [0], [1], [0, 0, 1, 1], [], []>} : vector<64x32xf32>, vector<32x32xf32>, vector<64x32xf32> -> vector<64x32xf32>
    %cst_8 = arith.constant dense<0.000000e+00> : vector<64x32xf32>
    %6 = tpu.matmul %0, %5, %cst_8 {dimension_numbers = #tpu.dot_dimension_numbers<[1], [0], [0], [1], [0, 0, 1, 1], [], []>} : vector<64x64xf32>, vector<64x32xf32>, vector<64x32xf32> -> vector<64x32xf32>
    %7 = math.tanh %6 : vector<64x32xf32>
    %c0_9 = arith.constant 0 : index
    %c0_10 = arith.constant 0 : index
    %8 = vector.load %arg4[%c0_9, %c0_10] : memref<32x16xf32, #tpu.memory_space<vmem>>, vector<32x16xf32>
    %cst_11 = arith.constant dense<0.000000e+00> : vector<64x16xf32>
    %9 = tpu.matmul %7, %8, %cst_11 {dimension_numbers = #tpu.dot_dimension_numbers<[1], [0], [0], [1], [0, 0, 1, 1], [], []>} : vector<64x32xf32>, vector<32x16xf32>, vector<64x16xf32> -> vector<64x16xf32>
    %cst_12 = arith.constant dense<0.000000e+00> : vector<64x16xf32>
    %10 = tpu.matmul %0, %9, %cst_12 {dimension_numbers = #tpu.dot_dimension_numbers<[1], [0], [0], [1], [0, 0, 1, 1], [], []>} : vector<64x64xf32>, vector<64x16xf32>, vector<64x16xf32> -> vector<64x16xf32>
    %c0_13 = arith.constant 0 : index
    %c0_14 = arith.constant 0 : index
    %11 = vector.load %arg5[%c0_13, %c0_14] : memref<32x3xf32, #tpu.memory_space<vmem>>, vector<32x3xf32>
    %cst_15 = arith.constant dense<0.000000e+00> : vector<64x3xf32>
    %12 = tpu.matmul %3, %11, %cst_15 {dimension_numbers = #tpu.dot_dimension_numbers<[1], [0], [0], [1], [0, 0, 1, 1], [], []>} : vector<64x32xf32>, vector<32x3xf32>, vector<64x3xf32> -> vector<64x3xf32>
    %c0_16 = arith.constant 0 : index
    %c0_17 = arith.constant 0 : index
    %13 = vector.load %arg6[%c0_16, %c0_17] : memref<32x3xf32, #tpu.memory_space<vmem>>, vector<32x3xf32>
    %cst_18 = arith.constant dense<0.000000e+00> : vector<64x3xf32>
    %14 = tpu.matmul %7, %13, %cst_18 {dimension_numbers = #tpu.dot_dimension_numbers<[1], [0], [0], [1], [0, 0, 1, 1], [], []>} : vector<64x32xf32>, vector<32x3xf32>, vector<64x3xf32> -> vector<64x3xf32>
    %15 = arith.addf %12, %14 : vector<64x3xf32>
    %c0_19 = arith.constant 0 : index
    %c0_20 = arith.constant 0 : index
    %16 = vector.load %arg7[%c0_19, %c0_20] : memref<16x3xf32, #tpu.memory_space<vmem>>, vector<16x3xf32>
    %cst_21 = arith.constant dense<0.000000e+00> : vector<64x3xf32>
    %17 = tpu.matmul %10, %16, %cst_21 {dimension_numbers = #tpu.dot_dimension_numbers<[1], [0], [0], [1], [0, 0, 1, 1], [], []>} : vector<64x16xf32>, vector<16x3xf32>, vector<64x3xf32> -> vector<64x3xf32>
    %18 = arith.addf %15, %17 : vector<64x3xf32>
    %c0_22 = arith.constant 0 : index
    %c0_23 = arith.constant 0 : index
    %19 = vector.load %arg8[%c0_22, %c0_23] : memref<64x3xf32, #tpu.memory_space<vmem>>, vector<64x3xf32>
    tpu.vector_store %arg8[%c0_22, %c0_23], %18 {strides = array<i32>} : memref<64x3xf32, #tpu.memory_space<vmem>>, vector<64x3xf32>,
    return
  }
}

</mosaic_0001>

<llo_original>
// kernel: layoutnet_forward.1
$region0: #{layoutnet_forward.1}
  #allocation0 [shape = 'u32[]', space=smem, size = 0x4, offset = 0x4, fixed_abs, tag = 'smem constant byte address 0x4 - core index']
  #allocation1 [shape = 'u32[72,128]{1,0:T(1,128)}', space=vmem, size = 0x9000, scoped, tag = 'internal scratch']
  %s0 = inlined_call_operand.vmem [shape: f32[64,64], index: 0, kind: input, shape index: {}]
  %s1 = inlined_call_operand.vmem [shape: f32[64,64], index: 1, kind: input, shape index: {}]
  %s2 = inlined_call_operand.vmem [shape: f32[64,32], index: 2, kind: input, shape index: {}]
  %s3 = inlined_call_operand.vmem [shape: f32[32,32], index: 3, kind: input, shape index: {}]
  %s4 = inlined_call_operand.vmem [shape: f32[32,16], index: 4, kind: input, shape index: {}]
  %s5 = inlined_call_operand.vmem [shape: f32[32,3], index: 5, kind: input, shape index: {}]
  %s6 = inlined_call_operand.vmem [shape: f32[32,3], index: 6, kind: input, shape index: {}]
  %s7 = inlined_call_operand.vmem [shape: f32[16,3], index: 7, kind: input, shape index: {}]
  %s8 = inlined_call_operand.vmem [shape: f32[64,3], index: 8, kind: output, shape index: {}]
  %s9 = sld [smem:[#allocation0]]
  $region42: #{layoutnet_forward.1} parent=0
    _
  %s11 = ssub.s32 1, %s9
  %s12 = scalar_select 0, %s11, %s9
  // Predicated region
  $region2: #{layoutnet_forward.1} parent=0 // pred_check
    _
  $region3: #{layoutnet_forward.1} parent=0 // pred_check_branch
    %14 = sbr.rel (0) target = $region5
  $region4: #{layoutnet_forward.1} parent=0 // pred_region
    _
  $region5: #{layoutnet_forward.1} parent=0 // pred_fallthru
    _
  // Predicated region
  $region6: #{layoutnet_forward.1} parent=0 // pred_check
    _
  $region7: #{layoutnet_forward.1} parent=0 // pred_check_branch
    %16 = sbr.rel (0) target = $region9
  $region8: #{layoutnet_forward.1} parent=0 // pred_region
    _
  $region9: #{layoutnet_forward.1} parent=0 // pred_fallthru
    _
  // Predicated region
  $region10: #{layoutnet_forward.1} parent=0 // pred_check
    _
  $region11: #{layoutnet_forward.1} parent=0 // pred_check_branch
    %18 = sbr.rel (0) target = $region13
  $region12: #{layoutnet_forward.1} parent=0 // pred_region
    _
  $region13: #{layoutnet_forward.1} parent=0 // pred_fallthru
    _
  // Predicated region
  $region14: #{layoutnet_forward.1} parent=0 // pred_check
    _
  $region15: #{layoutnet_forward.1} parent=0 // pred_check_branch
    %20 = sbr.rel (0) target = $region17
  $region16: #{layoutnet_forward.1} parent=0 // pred_region
    _
  $region17: #{layoutnet_forward.1} parent=0 // pred_fallthru
    _
  // Predicated region
  $region18: #{layoutnet_forward.1} parent=0 // pred_check
    _
  $region19: #{layoutnet_forward.1} parent=0 // pred_check_branch
    %22 = sbr.rel (0) target = $region21
  $region20: #{layoutnet_forward.1} parent=0 // pred_region
    _
  $region21: #{layoutnet_forward.1} parent=0 // pred_fallthru
    _
  // Predicated region
  $region22: #{layoutnet_forward.1} parent=0 // pred_check
    _
  $region23: #{layoutnet_forward.1} parent=0 // pred_check_branch
    %24 = sbr.rel (0) target = $region25
  $region24: #{layoutnet_forward.1} parent=0 // pred_region
    _
  $region25: #{layoutnet_forward.1} parent=0 // pred_fallthru
    _
  // Predicated region
  $region26: #{layoutnet_forward.1} parent=0 // pred_check
    _
  $region27: #{layoutnet_forward.1} parent=0 // pred_check_branch
    %26 = sbr.rel (0) target = $region29
  $region28: #{layoutnet_forward.1} parent=0 // pred_region
    _
  $region29: #{layoutnet_forward.1} parent=0 // pred_fallthru
    _
  // Predicated region
  $region30: #{layoutnet_forward.1} parent=0 // pred_check
    _
  $region31: #{layoutnet_forward.1} parent=0 // pred_check_branch
    %28 = sbr.rel (0) target = $region33
  $region32: #{layoutnet_forward.1} parent=0 // pred_region
    _
  $region33: #{layoutnet_forward.1} parent=0 // pred_fallthru
    _
  %v29 = vld [vmem:[%s1] sm:$0xff]
  %v30 = vld [vmem:[%s1 + $0x8] sm:$0xff]
  %v31 = vld [vmem:[%s1 + $0x10] sm:$0xff]
  %v32 = vld [vmem:[%s1 + $0x18] sm:$0xff]
  %v33 = vld [vmem:[%s1 + $0x20] sm:$0xff]
  %v34 = vld [vmem:[%s1 + $0x28] sm:$0xff]
  %v35 = vld [vmem:[%s1 + $0x30] sm:$0xff]
  %v36 = vld [vmem:[%s1 + $0x38] sm:$0xff]
  %v37 = vld [vmem:[%s0] sm:$0xff]
  %v38 = vld [vmem:[%s0 + $0x8] sm:$0xff]
  %v39 = vld [vmem:[%s0 + $0x10] sm:$0xff]
  %v40 = vld [vmem:[%s0 + $0x18] sm:$0xff]
  %v41 = vld [vmem:[%s0 + $0x20] sm:$0xff]
  %v42 = vld [vmem:[%s0 + $0x28] sm:$0xff]
  %v43 = vld [vmem:[%s0 + $0x30] sm:$0xff]
  %v44 = vld [vmem:[%s0 + $0x38] sm:$0xff]
  %v45 = vld [vmem:[%s2] sm:$0xff]
  %v46 = vld [vmem:[%s2 + $0x8] sm:$0xff]
  %v47 = vld [vmem:[%s2 + $0x10] sm:$0xff]
  %v48 = vld [vmem:[%s2 + $0x18] sm:$0xff]
  %v49 = vld [vmem:[%s2 + $0x20] sm:$0xff]
  %v50 = vld [vmem:[%s2 + $0x28] sm:$0xff]
  %v51 = vld [vmem:[%s2 + $0x30] sm:$0xff]
  %v52 = vld [vmem:[%s2 + $0x38] sm:$0xff]
  %vm53 = vcmask 523264
  %v55 = vsel %vm53, %v37, 0
  %v58 = vsel %vm53, %v38, 0
  %v61 = vsel %vm53, %v39, 0
  %v64 = vsel %vm53, %v40, 0
  %v67 = vsel %vm53, %v41, 0
  %v70 = vsel %vm53, %v42, 0
  %v73 = vsel %vm53, %v43, 0
  %v76 = vsel %vm53, %v44, 0
  %78 = vmatpush.msra.mxu0 0.0
  %79 = vmatpush.msra.mxu0 0.0
  %80 = vmatpush.msra.mxu0 0.0
  %81 = vmatpush.msra.mxu0 0.0
  %82 = vmatpush.msra.mxu0 0.0
  %83 = vmatpush.msra.mxu0 0.0
  %84 = vmatpush.msra.mxu0 0.0
  %85 = vmatpush.msra.mxu0 0.0
  %86 = vmatpush.msra.mxu0 %v52
  %87 = vmatpush.msra.mxu0 %v51
  %88 = vmatpush.msra.mxu0 %v50
  %89 = vmatpush.msra.mxu0 %v49
  %90 = vmatpush.msra.mxu0 %v48
  %91 = vmatpush.msra.mxu0 %v47
  %92 = vmatpush.msra.mxu0 %v46
  %93 = vmatpush.msra.mxu0 %v45
  %94 = vmatmul.f32.gmra.mxu0 %v55
  %v95 = vpop.f32.mrf.mxu0
  %v96 = vadd.f32 0.0, %v95
  %97 = vmatmul.f32.gmra.mxu0 %v58
  %v98 = vpop.f32.mrf.mxu0
  %v99 = vadd.f32 0.0, %v98
  %100 = vmatmul.f32.gmra.mxu0 %v61
  %v101 = vpop.f32.mrf.mxu0
  %v102 = vadd.f32 0.0, %v101
  %103 = vmatmul.f32.gmra.mxu0 %v64
  %v104 = vpop.f32.mrf.mxu0
  %v105 = vadd.f32 0.0, %v104
  %106 = vmatmul.f32.gmra.mxu0 %v67
  %v107 = vpop.f32.mrf.mxu0
  %v108 = vadd.f32 0.0, %v107
  %109 = vmatmul.f32.gmra.mxu0 %v70
  %v110 = vpop.f32.mrf.mxu0
  %v111 = vadd.f32 0.0, %v110
  %112 = vmatmul.f32.gmra.mxu0 %v73
  %v113 = vpop.f32.mrf.mxu0
  %v114 = vadd.f32 0.0, %v113
  %115 = vmatmul.f32.gmra.mxu0 %v76
  %v116 = vpop.f32.mrf.mxu0
  %v117 = vadd.f32 0.0, %v116
  %118 = vdwg.mxu0
  %v119 = vld [vmem:[%s3] sm:$0xff]
  %v120 = vld [vmem:[%s3 + $0x8] sm:$0xff]
  %v121 = vld [vmem:[%s3 + $0x10] sm:$0xff]
  %v122 = vld [vmem:[%s3 + $0x18] sm:$0xff]
  %vm123 = vcmask 261120
  %v125 = vsel %vm123, %v96, 0
  %v128 = vsel %vm123, %v99, 0
  %v131 = vsel %vm123, %v102, 0
  %v134 = vsel %vm123, %v105, 0
  %v137 = vsel %vm123, %v108, 0
  %v140 = vsel %vm123, %v111, 0
  %v143 = vsel %vm123, %v114, 0
  %v146 = vsel %vm123, %v117, 0
  %148 = vmatpush.msra.mxu0 0.0
  %149 = vmatpush.msra.mxu0 0.0
  %150 = vmatpush.msra.mxu0 0.0
  %151 = vmatpush.msra.mxu0 0.0
  %152 = vmatpush.msra.mxu0 0.0
  %153 = vmatpush.msra.mxu0 0.0
  %154 = vmatpush.msra.mxu0 0.0
  %155 = vmatpush.msra.mxu0 0.0
  %156 = vmatpush.msra.mxu0 0.0
  %157 = vmatpush.msra.mxu0 0.0
  %158 = vmatpush.msra.mxu0 0.0
  %159 = vmatpush.msra.mxu0 0.0
  %160 = vmatpush.msra.mxu0 %v122
  %161 = vmatpush.msra.mxu0 %v121
  %162 = vmatpush.msra.mxu0 %v120
  %163 = vmatpush.msra.mxu0 %v119
  %164 = vmatmul.f32.gmra.mxu0 %v125
  %v165 = vpop.f32.mrf.mxu0
  %v166 = vadd.f32 0.0, %v165
  %167 = vmatmul.f32.gmra.mxu0 %v128
  %v168 = vpop.f32.mrf.mxu0
  %v169 = vadd.f32 0.0, %v168
  %170 = vmatmul.f32.gmra.mxu0 %v131
  %v171 = vpop.f32.mrf.mxu0
  %v172 = vadd.f32 0.0, %v171
  %173 = vmatmul.f32.gmra.mxu0 %v134
  %v174 = vpop.f32.mrf.mxu0
  %v175 = vadd.f32 0.0, %v174
  %176 = vmatmul.f32.gmra.mxu0 %v137
  %v177 = vpop.f32.mrf.mxu0
  %v178 = vadd.f32 0.0, %v177
  %179 = vmatmul.f32.gmra.mxu0 %v140
  %v180 = vpop.f32.mrf.mxu0
  %v181 = vadd.f32 0.0, %v180
  %182 = vmatmul.f32.gmra.mxu0 %v143
  %v183 = vpop.f32.mrf.mxu0
  %v184 = vadd.f32 0.0, %v183
  %185 = vmatmul.f32.gmra.mxu0 %v146
  %v186 = vpop.f32.mrf.mxu0
  %v187 = vadd.f32 0.0, %v186
  %188 = vdwg.mxu0
  %v190 = vsel %vm53, %v29, 0
  %v193 = vsel %vm53, %v30, 0
  %v196 = vsel %vm53, %v31, 0
  %v199 = vsel %vm53, %v32, 0
  %v202 = vsel %vm53, %v33, 0
  %v205 = vsel %vm53, %v34, 0
  %v208 = vsel %vm53, %v35, 0
  %v211 = vsel %vm53, %v36, 0
  %213 = vmatpush.msra.mxu0 0.0
  %214 = vmatpush.msra.mxu0 0.0
  %215 = vmatpush.msra.mxu0 0.0
  %216 = vmatpush.msra.mxu0 0.0
  %217 = vmatpush.msra.mxu0 0.0
  %218 = vmatpush.msra.mxu0 0.0
  %219 = vmatpush.msra.mxu0 0.0
  %220 = vmatpush.msra.mxu0 0.0
  %221 = vmatpush.msra.mxu0 %v187
  %222 = vmatpush.msra.mxu0 %v184
  %223 = vmatpush.msra.mxu0 %v181
  %224 = vmatpush.msra.mxu0 %v178
  %225 = vmatpush.msra.mxu0 %v175
  %226 = vmatpush.msra.mxu0 %v172
  %227 = vmatpush.msra.mxu0 %v169
  %228 = vmatpush.msra.mxu0 %v166
  %229 = vmatmul.f32.gmra.mxu0 %v190
  %v230 = vpop.f32.mrf.mxu0
  %v231 = vadd.f32 0.0, %v230
  %232 = vmatmul.f32.gmra.mxu0 %v193
  %v233 = vpop.f32.mrf.mxu0
  %v234 = vadd.f32 0.0, %v233
  %235 = vmatmul.f32.gmra.mxu0 %v196
  %v236 = vpop.f32.mrf.mxu0
  %v237 = vadd.f32 0.0, %v236
  %238 = vmatmul.f32.gmra.mxu0 %v199
  %v239 = vpop.f32.mrf.mxu0
  %v240 = vadd.f32 0.0, %v239
  %241 = vmatmul.f32.gmra.mxu0 %v202
  %v242 = vpop.f32.mrf.mxu0
  %v243 = vadd.f32 0.0, %v242
  %244 = vmatmul.f32.gmra.mxu0 %v205
  %v245 = vpop.f32.mrf.mxu0
  %v246 = vadd.f32 0.0, %v245
  %247 = vmatmul.f32.gmra.mxu0 %v208
  %v248 = vpop.f32.mrf.mxu0
  %v249 = vadd.f32 0.0, %v248
  %250 = vmatmul.f32.gmra.mxu0 %v211
  %v251 = vpop.f32.mrf.mxu0
  %v252 = vadd.f32 0.0, %v251
  %253 = vdwg.mxu0
  %v254 = vtanh.pop %v231
  %v255 = vtanh.pop %v234
  %v256 = vtanh.pop %v237
  %v257 = vtanh.pop %v240
  %v258 = vtanh.pop %v243
  %v259 = vtanh.pop %v246
  %v260 = vtanh.pop %v249
  %v261 = vtanh.pop %v252
  %v262 = vld [vmem:[%s4] sm:$0xff]
  %v263 = vld [vmem:[%s4 + $0x8] sm:$0xff]
  %v264 = vld [vmem:[%s4 + $0x10] sm:$0xff]
  %v265 = vld [vmem:[%s4 + $0x18] sm:$0xff]
  %v267 = vsel %vm123, %v254, 0
  %v270 = vsel %vm123, %v255, 0
  %v273 = vsel %vm123, %v256, 0
  %v276 = vsel %vm123, %v257, 0
  %v279 = vsel %vm123, %v258, 0
  %v282 = vsel %vm123, %v259, 0
  %v285 = vsel %vm123, %v260, 0
  %v288 = vsel %vm123, %v261, 0
  %290 = vmatpush.msra.mxu0 0.0
  %291 = vmatpush.msra.mxu0 0.0
  %292 = vmatpush.msra.mxu0 0.0
  %293 = vmatpush.msra.mxu0 0.0
  %294 = vmatpush.msra.mxu0 0.0
  %295 = vmatpush.msra.mxu0 0.0
  %296 = vmatpush.msra.mxu0 0.0
  %297 = vmatpush.msra.mxu0 0.0
  %298 = vmatpush.msra.mxu0 0.0
  %299 = vmatpush.msra.mxu0 0.0
  %300 = vmatpush.msra.mxu0 0.0
  %301 = vmatpush.msra.mxu0 0.0
  %302 = vmatpush.msra.mxu0 %v265
  %303 = vmatpush.msra.mxu0 %v264
  %304 = vmatpush.msra.mxu0 %v263
  %305 = vmatpush.msra.mxu0 %v262
  %306 = vmatmul.f32.gmra.mxu0 %v267
  %v307 = vpop.f32.mrf.mxu0
  %v308 = vadd.f32 0.0, %v307
  %309 = vmatmul.f32.gmra.mxu0 %v270
  %v310 = vpop.f32.mrf.mxu0
  %v311 = vadd.f32 0.0, %v310
  %312 = vmatmul.f32.gmra.mxu0 %v273
  %v313 = vpop.f32.mrf.mxu0
  %v314 = vadd.f32 0.0, %v313
  %315 = vmatmul.f32.gmra.mxu0 %v276
  %v316 = vpop.f32.mrf.mxu0
  %v317 = vadd.f32 0.0, %v316
  %318 = vmatmul.f32.gmra.mxu0 %v279
  %v319 = vpop.f32.mrf.mxu0
  %v320 = vadd.f32 0.0, %v319
  %321 = vmatmul.f32.gmra.mxu0 %v282
  %v322 = vpop.f32.mrf.mxu0
  %v323 = vadd.f32 0.0, %v322
  %324 = vmatmul.f32.gmra.mxu0 %v285
  %v325 = vpop.f32.mrf.mxu0
  %v326 = vadd.f32 0.0, %v325
  %327 = vmatmul.f32.gmra.mxu0 %v288
  %v328 = vpop.f32.mrf.mxu0
  %v329 = vadd.f32 0.0, %v328
  %330 = vdwg.mxu0
  %331 = vmatpush.msra.mxu0 0.0
  %332 = vmatpush.msra.mxu0 0.0
  %333 = vmatpush.msra.mxu0 0.0
  %334 = vmatpush.msra.mxu0 0.0
  %335 = vmatpush.msra.mxu0 0.0
  %336 = vmatpush.msra.mxu0 0.0
  %337 = vmatpush.msra.mxu0 0.0
  %338 = vmatpush.msra.mxu0 0.0
  %339 = vmatpush.msra.mxu0 %v329
  %340 = vmatpush.msra.mxu0 %v326
  %341 = vmatpush.msra.mxu0 %v323
  %342 = vmatpush.msra.mxu0 %v320
  %343 = vmatpush.msra.mxu0 %v317
  %344 = vmatpush.msra.mxu0 %v314
  %345 = vmatpush.msra.mxu0 %v311
  %346 = vmatpush.msra.mxu0 %v308
  %347 = vmatmul.f32.gmra.mxu0 %v190
  %v348 = vpop.f32.mrf.mxu0
  %v349 = vadd.f32 0.0, %v348
  %350 = vmatmul.f32.gmra.mxu0 %v193
  %v351 = vpop.f32.mrf.mxu0
  %v352 = vadd.f32 0.0, %v351
  %353 = vmatmul.f32.gmra.mxu0 %v196
  %v354 = vpop.f32.mrf.mxu0
  %v355 = vadd.f32 0.0, %v354
  %356 = vmatmul.f32.gmra.mxu0 %v199
  %v357 = vpop.f32.mrf.mxu0
  %v358 = vadd.f32 0.0, %v357
  %359 = vmatmul.f32.gmra.mxu0 %v202
  %v360 = vpop.f32.mrf.mxu0
  %v361 = vadd.f32 0.0, %v360
  %362 = vmatmul.f32.gmra.mxu0 %v205
  %v363 = vpop.f32.mrf.mxu0
  %v364 = vadd.f32 0.0, %v363
  %365 = vmatmul.f32.gmra.mxu0 %v208
  %v366 = vpop.f32.mrf.mxu0
  %v367 = vadd.f32 0.0, %v366
  %368 = vmatmul.f32.gmra.mxu0 %v211
  %v369 = vpop.f32.mrf.mxu0
  %v370 = vadd.f32 0.0, %v369
  %371 = vdwg.mxu0
  %v372 = vld [vmem:[%s5] sm:$0xff]
  %v373 = vld [vmem:[%s5 + $0x8] sm:$0xff]
  %v374 = vld [vmem:[%s5 + $0x10] sm:$0xff]
  %v375 = vld [vmem:[%s5 + $0x18] sm:$0xff]
  %v376 = vld [vmem:[%s6] sm:$0xff]
  %v377 = vld [vmem:[%s6 + $0x8] sm:$0xff]
  %v378 = vld [vmem:[%s6 + $0x10] sm:$0xff]
  %v379 = vld [vmem:[%s6 + $0x18] sm:$0xff]
  %380 = vmatpush.msra.mxu0 0.0
  %381 = vmatpush.msra.mxu0 0.0
  %382 = vmatpush.msra.mxu0 0.0
  %383 = vmatpush.msra.mxu0 0.0
  %384 = vmatpush.msra.mxu0 0.0
  %385 = vmatpush.msra.mxu0 0.0
  %386 = vmatpush.msra.mxu0 0.0
  %387 = vmatpush.msra.mxu0 0.0
  %388 = vmatpush.msra.mxu0 0.0
  %389 = vmatpush.msra.mxu0 0.0
  %390 = vmatpush.msra.mxu0 0.0
  %391 = vmatpush.msra.mxu0 0.0
  %392 = vmatpush.msra.mxu0 %v379
  %393 = vmatpush.msra.mxu0 %v378
  %394 = vmatpush.msra.mxu0 %v377
  %395 = vmatpush.msra.mxu0 %v376
  %396 = vmatmul.f32.gmra.mxu0 %v267
  %v397 = vpop.f32.mrf.mxu0
  %v398 = vadd.f32 0.0, %v397
  %399 = vmatmul.f32.gmra.mxu0 %v270
  %v400 = vpop.f32.mrf.mxu0
  %v401 = vadd.f32 0.0, %v400
  %402 = vmatmul.f32.gmra.mxu0 %v273
  %v403 = vpop.f32.mrf.mxu0
  %v404 = vadd.f32 0.0, %v403
  %405 = vmatmul.f32.gmra.mxu0 %v276
  %v406 = vpop.f32.mrf.mxu0
  %v407 = vadd.f32 0.0, %v406
  %408 = vmatmul.f32.gmra.mxu0 %v279
  %v409 = vpop.f32.mrf.mxu0
  %v410 = vadd.f32 0.0, %v409
  %411 = vmatmul.f32.gmra.mxu0 %v282
  %v412 = vpop.f32.mrf.mxu0
  %v413 = vadd.f32 0.0, %v412
  %414 = vmatmul.f32.gmra.mxu0 %v285
  %v415 = vpop.f32.mrf.mxu0
  %v416 = vadd.f32 0.0, %v415
  %417 = vmatmul.f32.gmra.mxu0 %v288
  %v418 = vpop.f32.mrf.mxu0
  %v419 = vadd.f32 0.0, %v418
  %420 = vdwg.mxu0
  %421 = vmatpush.msra.mxu0 0.0
  %422 = vmatpush.msra.mxu0 0.0
  %423 = vmatpush.msra.mxu0 0.0
  %424 = vmatpush.msra.mxu0 0.0
  %425 = vmatpush.msra.mxu0 0.0
  %426 = vmatpush.msra.mxu0 0.0
  %427 = vmatpush.msra.mxu0 0.0
  %428 = vmatpush.msra.mxu0 0.0
  %429 = vmatpush.msra.mxu0 0.0
  %430 = vmatpush.msra.mxu0 0.0
  %431 = vmatpush.msra.mxu0 0.0
  %432 = vmatpush.msra.mxu0 0.0
  %433 = vmatpush.msra.mxu0 %v375
  %434 = vmatpush.msra.mxu0 %v374
  %435 = vmatpush.msra.mxu0 %v373
  %436 = vmatpush.msra.mxu0 %v372
  %437 = vmatmul.f32.gmra.mxu0 %v125
  %v438 = vpop.f32.mrf.mxu0
  %v439 = vadd.f32 %v398, %v438
  %440 = vmatmul.f32.gmra.mxu0 %v128
  %v441 = vpop.f32.mrf.mxu0
  %v442 = vadd.f32 %v401, %v441
  %443 = vmatmul.f32.gmra.mxu0 %v131
  %v444 = vpop.f32.mrf.mxu0
  %v445 = vadd.f32 %v404, %v444
  %446 = vmatmul.f32.gmra.mxu0 %v134
  %v447 = vpop.f32.mrf.mxu0
  %v448 = vadd.f32 %v407, %v447
  %449 = vmatmul.f32.gmra.mxu0 %v137
  %v450 = vpop.f32.mrf.mxu0
  %v451 = vadd.f32 %v410, %v450
  %452 = vmatmul.f32.gmra.mxu0 %v140
  %v453 = vpop.f32.mrf.mxu0
  %v454 = vadd.f32 %v413, %v453
  %455 = vmatmul.f32.gmra.mxu0 %v143
  %v456 = vpop.f32.mrf.mxu0
  %v457 = vadd.f32 %v416, %v456
  %458 = vmatmul.f32.gmra.mxu0 %v146
  %v459 = vpop.f32.mrf.mxu0
  %v460 = vadd.f32 %v419, %v459
  %461 = vdwg.mxu0
  %v462 = vld [vmem:[%s7] sm:$0xff]
  %v463 = vld [vmem:[%s7 + $0x8] sm:$0xff]
  %vm464 = vcmask 130048
  %v466 = vsel %vm464, %v349, 0
  %v469 = vsel %vm464, %v352, 0
  %v472 = vsel %vm464, %v355, 0
  %v475 = vsel %vm464, %v358, 0
  %v478 = vsel %vm464, %v361, 0
  %v481 = vsel %vm464, %v364, 0
  %v484 = vsel %vm464, %v367, 0
  %v487 = vsel %vm464, %v370, 0
  %489 = vmatpush.msra.mxu0 0.0
  %490 = vmatpush.msra.mxu0 0.0
  %491 = vmatpush.msra.mxu0 0.0
  %492 = vmatpush.msra.mxu0 0.0
  %493 = vmatpush.msra.mxu0 0.0
  %494 = vmatpush.msra.mxu0 0.0
  %495 = vmatpush.msra.mxu0 0.0
  %496 = vmatpush.msra.mxu0 0.0
  %497 = vmatpush.msra.mxu0 0.0
  %498 = vmatpush.msra.mxu0 0.0
  %499 = vmatpush.msra.mxu0 0.0
  %500 = vmatpush.msra.mxu0 0.0
  %501 = vmatpush.msra.mxu0 0.0
  %502 = vmatpush.msra.mxu0 0.0
  %503 = vmatpush.msra.mxu0 %v463
  %504 = vmatpush.msra.mxu0 %v462
  %505 = vmatmul.f32.gmra.mxu0 %v466
  %v506 = vpop.f32.mrf.mxu0
  %v507 = vadd.f32 0.0, %v506
  %508 = vmatmul.f32.gmra.mxu0 %v469
  %v509 = vpop.f32.mrf.mxu0
  %v510 = vadd.f32 0.0, %v509
  %511 = vmatmul.f32.gmra.mxu0 %v472
  %v512 = vpop.f32.mrf.mxu0
  %v513 = vadd.f32 0.0, %v512
  %514 = vmatmul.f32.gmra.mxu0 %v475
  %v515 = vpop.f32.mrf.mxu0
  %v516 = vadd.f32 0.0, %v515
  %517 = vmatmul.f32.gmra.mxu0 %v478
  %v518 = vpop.f32.mrf.mxu0
  %v519 = vadd.f32 0.0, %v518
  %520 = vmatmul.f32.gmra.mxu0 %v481
  %v521 = vpop.f32.mrf.mxu0
  %v522 = vadd.f32 0.0, %v521
  %523 = vmatmul.f32.gmra.mxu0 %v484
  %v524 = vpop.f32.mrf.mxu0
  %v525 = vadd.f32 0.0, %v524
  %526 = vmatmul.f32.gmra.mxu0 %v487
  %v527 = vpop.f32.mrf.mxu0
  %v528 = vadd.f32 0.0, %v527
  %529 = vdwg.mxu0
  %v530 = vadd.f32 %v439, %v507
  %v531 = vadd.f32 %v442, %v510
  %v532 = vadd.f32 %v445, %v513
  %v533 = vadd.f32 %v448, %v516
  %v534 = vadd.f32 %v451, %v519
  %v535 = vadd.f32 %v454, %v522
  %v536 = vadd.f32 %v457, %v525
  %v537 = vadd.f32 %v460, %v528
  %vm538 = vcmask 23552
  %539 = vst.msk [vmem:[%s8] sm:$0xff] %vm538, %v530
  %540 = vst.msk [vmem:[%s8 + $0x8] sm:$0xff] %vm538, %v531
  %541 = vst.msk [vmem:[%s8 + $0x10] sm:$0xff] %vm538, %v532
  %542 = vst.msk [vmem:[%s8 + $0x18] sm:$0xff] %vm538, %v533
  %543 = vst.msk [vmem:[%s8 + $0x20] sm:$0xff] %vm538, %v534
  %544 = vst.msk [vmem:[%s8 + $0x28] sm:$0xff] %vm538, %v535
  %545 = vst.msk [vmem:[%s8 + $0x30] sm:$0xff] %vm538, %v536
  %546 = vst.msk [vmem:[%s8 + $0x38] sm:$0xff] %vm538, %v537
  // Predicated region
  $region34: #{layoutnet_forward.1} parent=0 // pred_check
    _
  $region35: #{layoutnet_forward.1} parent=0 // pred_check_branch
    %548 = sbr.rel (0) target = $region37
  $region36: #{layoutnet_forward.1} parent=0 // pred_region
    _
  $region37: #{layoutnet_forward.1} parent=0 // pred_fallthru
    _
  // Predicated region
  $region38: #{layoutnet_forward.1} parent=0 // pred_check
    _
  $region39: #{layoutnet_forward.1} parent=0 // pred_check_branch
    %550 = sbr.rel (0) target = $region41
  $region40: #{layoutnet_forward.1} parent=0 // pred_region
    _
  $region41: #{layoutnet_forward.1} parent=0 // pred_fallthru
    _

</llo_original>
